<compile_context>
chip_gen: v7x
topology: tpu7x:2x2x1
jax: 0.10.0
libtpu: 0.0.40
codegen_flags: <defaults>
</compile_context>

<pallas_src>
import functools

import jax
import jax.numpy as jnp
from jax.experimental import pallas as pl
from jax.experimental.pallas import tpu as pltpu


# ----------------------------------------------------------------------------- kernel
def ae_kernel(x_ref,
              w1_ref, b1_ref,
              w2_ref, b2_ref,
              w3_ref, b3_ref,
              w4_ref, b4_ref,
              o_ref):
    bf16 = jnp.bfloat16
    # encoder
    h = x_ref[...].astype(bf16)                                   # cast in-kernel (no extra HBM pass)
    h = jnp.dot(h, w1_ref[...], preferred_element_type=jnp.float32)
    h = jnp.maximum(h + b1_ref[...], 0.0).astype(bf16)
    h = jnp.dot(h, w2_ref[...], preferred_element_type=jnp.float32)
    h = jnp.maximum(h + b2_ref[...], 0.0).astype(bf16)
    # decoder
    h = jnp.dot(h, w3_ref[...], preferred_element_type=jnp.float32)
    h = jnp.maximum(h + b3_ref[...], 0.0).astype(bf16)
    h = jnp.dot(h, w4_ref[...], preferred_element_type=jnp.float32)
    o_ref[...] = (h + b4_ref[...]).astype(o_ref.dtype)


# ----------------------------------------------------------------------------- param prep (one-time)
def prepare_params(params):
    """One-time preprocessing: pad the 64-wide bottleneck to 128 lanes, cast weights to bf16."""
    bf16, f32 = jnp.bfloat16, jnp.float32
    return dict(
        w1=params["w1"].astype(bf16),                                  # (D, 128)
        b1=params["b1"].astype(f32),                                   # (1, 128)
        w2=jnp.pad(params["w2"], ((0, 0), (0, 64))).astype(bf16),      # (128, 128)
        b2=jnp.pad(params["b2"], ((0, 0), (0, 64))).astype(f32),       # (1, 128)
        w3=jnp.pad(params["w3"], ((0, 64), (0, 0))).astype(bf16),      # (128, 128)
        b3=params["b3"].astype(f32),                                   # (1, 128)
        w4=params["w4"].astype(bf16),                                  # (128, D)
        b4=params["b4"].astype(f32),                                   # (1, D)
    )


# ----------------------------------------------------------------------------- wrapper
@functools.partial(jax.jit, static_argnames=("tile_b",))
def autoencoder_forward(x, prepped, *, tile_b=1024):
    """x: (B, D) float32; prepped: output of prepare_params().  Returns (B, D) in x.dtype."""
    B, D = x.shape

    # --- batch tile: one full-array block when B fits, else a multiple-of-8 tile with
    # --- a Pallas-masked partial last block (no wrapper pad / slice passes over x).
    tile_b = max(8, (tile_b // 8) * 8)
    tb = B if B <= tile_b else tile_b
    grid = pl.cdiv(B, tb)

    w1, b1 = prepped["w1"], prepped["b1"]
    w2, b2 = prepped["w2"], prepped["b2"]
    w3, b3 = prepped["w3"], prepped["b3"]
    w4, b4 = prepped["w4"], prepped["b4"]

    full = lambda a: pl.BlockSpec(a.shape, lambda i: (0, 0))   # weights resident in VMEM

    flops = 2 * B * (D * 128 + 128 * 128 + 128 * 128 + 128 * D)
    bytes_accessed = (
        x.size * x.dtype.itemsize                               # f32 input read
        + B * D * x.dtype.itemsize                              # f32 output write
        + 2 * (w1.size + w2.size + w3.size + w4.size)           # bf16 weights (read once)
        + 4 * (b1.size + b2.size + b3.size + b4.size)           # f32 biases
    )

    return pl.pallas_call(
        ae_kernel,
        out_shape=jax.ShapeDtypeStruct((B, D), x.dtype),
        grid_spec=pltpu.PrefetchScalarGridSpec(
            num_scalar_prefetch=0,
            grid=(grid,),
            in_specs=[
                pl.BlockSpec((tb, D), lambda i: (i, 0)),        # x tile
                full(w1), full(b1),
                full(w2), full(b2),
                full(w3), full(b3),
                full(w4), full(b4),
            ],
            out_specs=pl.BlockSpec((tb, D), lambda i: (i, 0)),
        ),
        compiler_params=pltpu.CompilerParams(
            dimension_semantics=("parallel",),                  # batch tiles are independent
            vmem_limit_bytes=48 * 1024 * 1024,                  # < v7x's 64 MiB physical VMEM
        ),
        cost_estimate=pl.CostEstimate(
            flops=flops, transcendentals=0, bytes_accessed=bytes_accessed),
    )(x, w1, b1, w2, b2, w3, b3, w4, b4)


# ----------------------------------------------------------------------------- params & refs
def init_params(key, input_size):
    """PyTorch Linear init (weight stored (out, in)), then transposed to (in, out)."""
    def linear(key, fan_in, fan_out):
        kw, kb = jax.random.split(key)
        bound = 1.0 / jnp.sqrt(fan_in)
        w = jax.random.uniform(kw, (fan_out, fan_in), jnp.float32, -bound, bound)
        b = jax.random.uniform(kb, (fan_out,), jnp.float32, -bound, bound)
        return w.T, b.reshape(1, fan_out)   # (in, out), (1, out)

    k1, k2, k3, k4 = jax.random.split(key, 4)
    w1, b1 = linear(k1, input_size, 128)
    w2, b2 = linear(k2, 128, 64)
    w3, b3 = linear(k3, 64, 128)
    w4, b4 = linear(k4, 128, input_size)
    return dict(w1=w1, b1=b1, w2=w2, b2=b2, w3=w3, b3=b3, w4=w4, b4=b4)


def reference_forward_f32(x, p):
    h = jnp.maximum(x @ p["w1"] + p["b1"], 0.0)
    h = jnp.maximum(h @ p["w2"] + p["b2"], 0.0)
    h = jnp.maximum(h @ p["w3"] + p["b3"], 0.0)
    return h @ p["w4"] + p["b4"]


def reference_forward_bf16(x, p):
    """Emulates the kernel's numerics: bf16 dot inputs, f32 accumulation/bias/ReLU."""
    bf, f32 = jnp.bfloat16, jnp.float32
    h = x.astype(bf)
    h = jnp.maximum(jnp.dot(h, p["w1"].astype(bf), preferred_element_type=f32) + p["b1"], 0.0).astype(bf)
    h = jnp.maximum(jnp.dot(h, p["w2"].astype(bf), preferred_element_type=f32) + p["b2"], 0.0).astype(bf)
    h = jnp.maximum(jnp.dot(h, p["w3"].astype(bf), preferred_element_type=f32) + p["b3"], 0.0).astype(bf)
    return jnp.dot(h, p["w4"].astype(bf), preferred_element_type=f32) + p["b4"]


# ----------------------------------------------------------------------------- demo
if __name__ == "__main__":
    INPUT_SIZE = 256   # feature dim of the autoencoder
    BATCH = 64         # small demo batch -> single full-array batch block

    key = jax.random.PRNGKey(0)
    kx, kp = jax.random.split(key)
    x = jax.random.normal(kx, (BATCH, INPUT_SIZE), jnp.float32)
    params = init_params(kp, INPUT_SIZE)
    prepped = prepare_params(params)       # one-time weight prep (outside the jitted forward)

    out = autoencoder_forward(x, prepped)
    out = jax.block_until_ready(out)
    assert out.shape == (BATCH, INPUT_SIZE)
    assert out.dtype == x.dtype

    # tight check vs a reference that emulates the kernel's bf16/f32 numerics
    ref_bf = reference_forward_bf16(x, params)
    assert jnp.allclose(out, ref_bf, atol=5e-3, rtol=5e-3)

    # loose check vs the full-f32 PyTorch-equivalent forward (bf16 quantization only)
    ref_f32 = reference_forward_f32(x, params)
    assert jnp.allclose(out, ref_f32, atol=1e-1, rtol=1e-1)

    print("KERNEL_OK")
</pallas_src>

<mosaic_0001>
module attributes {stable_mosaic.version = 11 : i64} {
  func.func @ae_kernel(%arg0: i32, %arg1: memref<64x256xf32, #tpu.memory_space<vmem>>, %arg2: memref<256x128xbf16, #tpu.memory_space<vmem>>, %arg3: memref<1x128xf32, #tpu.memory_space<vmem>>, %arg4: memref<128x128xbf16, #tpu.memory_space<vmem>>, %arg5: memref<1x128xf32, #tpu.memory_space<vmem>>, %arg6: memref<128x128xbf16, #tpu.memory_space<vmem>>, %arg7: memref<1x128xf32, #tpu.memory_space<vmem>>, %arg8: memref<128x256xbf16, #tpu.memory_space<vmem>>, %arg9: memref<1x256xf32, #tpu.memory_space<vmem>>, %arg10: memref<64x256xf32, #tpu.memory_space<vmem>>) attributes {dimension_semantics = [#tpu.dimension_semantics<parallel>], iteration_bounds = array<i64: 1>, scalar_prefetch = 0 : i64, scratch_operands = 0 : i64, tpu.core_type = #tpu.core_type<tc>, window_params = [{transform_indices = @transform_0, window_bounds = array<i64: 64, 256>}, {pipeline_mode = #tpu.pipeline_mode<synchronous>, transform_indices = @transform_1, window_bounds = array<i64: 256, 128>}, {pipeline_mode = #tpu.pipeline_mode<synchronous>, transform_indices = @transform_2, window_bounds = array<i64: 1, 128>}, {pipeline_mode = #tpu.pipeline_mode<synchronous>, transform_indices = @transform_3, window_bounds = array<i64: 128, 128>}, {pipeline_mode = #tpu.pipeline_mode<synchronous>, transform_indices = @transform_4, window_bounds = array<i64: 1, 128>}, {pipeline_mode = #tpu.pipeline_mode<synchronous>, transform_indices = @transform_5, window_bounds = array<i64: 128, 128>}, {pipeline_mode = #tpu.pipeline_mode<synchronous>, transform_indices = @transform_6, window_bounds = array<i64: 1, 128>}, {pipeline_mode = #tpu.pipeline_mode<synchronous>, transform_indices = @transform_7, window_bounds = array<i64: 128, 256>}, {pipeline_mode = #tpu.pipeline_mode<synchronous>, transform_indices = @transform_8, window_bounds = array<i64: 1, 256>}, {transform_indices = @transform_9, window_bounds = array<i64: 64, 256>}]} {
    %c0 = arith.constant 0 : index
    %c0_0 = arith.constant 0 : index
    %0 = vector.load %arg1[%c0, %c0_0] : memref<64x256xf32, #tpu.memory_space<vmem>>, vector<64x256xf32>
    %1 = arith.truncf %0 : vector<64x256xf32> to vector<64x256xbf16>
    %c0_1 = arith.constant 0 : index
    %c0_2 = arith.constant 0 : index
    %2 = vector.load %arg2[%c0_1, %c0_2] : memref<256x128xbf16, #tpu.memory_space<vmem>>, vector<256x128xbf16>
    %cst = arith.constant dense<0.000000e+00> : vector<64x128xf32>
    %3 = tpu.matmul %1, %2, %cst {dimension_numbers = #tpu.dot_dimension_numbers<[1], [0], [0], [1], [0, 0, 1, 1], [], []>} : vector<64x256xbf16>, vector<256x128xbf16>, vector<64x128xf32> -> vector<64x128xf32>
    %c0_3 = arith.constant 0 : index
    %c0_4 = arith.constant 0 : index
    %4 = vector.load %arg3[%c0_3, %c0_4] : memref<1x128xf32, #tpu.memory_space<vmem>>, vector<1x128xf32>
    %5 = vector.broadcast %4 : vector<1x128xf32> to vector<64x128xf32>
    %6 = arith.addf %3, %5 : vector<64x128xf32>
    %cst_5 = arith.constant 0.000000e+00 : f32
    %7 = vector.broadcast %cst_5 : f32 to vector<64x128xf32>
    %8 = arith.maximumf %6, %7 : vector<64x128xf32>
    %9 = arith.truncf %8 : vector<64x128xf32> to vector<64x128xbf16>
    %c0_6 = arith.constant 0 : index
    %c0_7 = arith.constant 0 : index
    %10 = vector.load %arg4[%c0_6, %c0_7] : memref<128x128xbf16, #tpu.memory_space<vmem>>, vector<128x128xbf16>
    %cst_8 = arith.constant dense<0.000000e+00> : vector<64x128xf32>
    %11 = tpu.matmul %9, %10, %cst_8 {dimension_numbers = #tpu.dot_dimension_numbers<[1], [0], [0], [1], [0, 0, 1, 1], [], []>} : vector<64x128xbf16>, vector<128x128xbf16>, vector<64x128xf32> -> vector<64x128xf32>
    %c0_9 = arith.constant 0 : index
    %c0_10 = arith.constant 0 : index
    %12 = vector.load %arg5[%c0_9, %c0_10] : memref<1x128xf32, #tpu.memory_space<vmem>>, vector<1x128xf32>
    %13 = vector.broadcast %12 : vector<1x128xf32> to vector<64x128xf32>
    %14 = arith.addf %11, %13 : vector<64x128xf32>
    %cst_11 = arith.constant 0.000000e+00 : f32
    %15 = vector.broadcast %cst_11 : f32 to vector<64x128xf32>
    %16 = arith.maximumf %14, %15 : vector<64x128xf32>
    %17 = arith.truncf %16 : vector<64x128xf32> to vector<64x128xbf16>
    %c0_12 = arith.constant 0 : index
    %c0_13 = arith.constant 0 : index
    %18 = vector.load %arg6[%c0_12, %c0_13] : memref<128x128xbf16, #tpu.memory_space<vmem>>, vector<128x128xbf16>
    %cst_14 = arith.constant dense<0.000000e+00> : vector<64x128xf32>
    %19 = tpu.matmul %17, %18, %cst_14 {dimension_numbers = #tpu.dot_dimension_numbers<[1], [0], [0], [1], [0, 0, 1, 1], [], []>} : vector<64x128xbf16>, vector<128x128xbf16>, vector<64x128xf32> -> vector<64x128xf32>
    %c0_15 = arith.constant 0 : index
    %c0_16 = arith.constant 0 : index
    %20 = vector.load %arg7[%c0_15, %c0_16] : memref<1x128xf32, #tpu.memory_space<vmem>>, vector<1x128xf32>
    %21 = vector.broadcast %20 : vector<1x128xf32> to vector<64x128xf32>
    %22 = arith.addf %19, %21 : vector<64x128xf32>
    %cst_17 = arith.constant 0.000000e+00 : f32
    %23 = vector.broadcast %cst_17 : f32 to vector<64x128xf32>
    %24 = arith.maximumf %22, %23 : vector<64x128xf32>
    %25 = arith.truncf %24 : vector<64x128xf32> to vector<64x128xbf16>
    %c0_18 = arith.constant 0 : index
    %c0_19 = arith.constant 0 : index
    %26 = vector.load %arg8[%c0_18, %c0_19] : memref<128x256xbf16, #tpu.memory_space<vmem>>, vector<128x256xbf16>
    %cst_20 = arith.constant dense<0.000000e+00> : vector<64x256xf32>
    %27 = tpu.matmul %25, %26, %cst_20 {dimension_numbers = #tpu.dot_dimension_numbers<[1], [0], [0], [1], [0, 0, 1, 1], [], []>} : vector<64x128xbf16>, vector<128x256xbf16>, vector<64x256xf32> -> vector<64x256xf32>
    %c0_21 = arith.constant 0 : index
    %c0_22 = arith.constant 0 : index
    %28 = vector.load %arg9[%c0_21, %c0_22] : memref<1x256xf32, #tpu.memory_space<vmem>>, vector<1x256xf32>
    %29 = vector.broadcast %28 : vector<1x256xf32> to vector<64x256xf32>
    %30 = arith.addf %27, %29 : vector<64x256xf32>
    %c0_23 = arith.constant 0 : index
    %c0_24 = arith.constant 0 : index
    %31 = vector.load %arg10[%c0_23, %c0_24] : memref<64x256xf32, #tpu.memory_space<vmem>>, vector<64x256xf32>
    tpu.vector_store %arg10[%c0_23, %c0_24], %30 {strides = array<i32>} : memref<64x256xf32, #tpu.memory_space<vmem>>, vector<64x256xf32>,
    return
  }
  func.func @transform_0(%arg0: i32) -> (i32, i32) {
    %c0_i32 = arith.constant 0 : i32
    %c0_i32_0 = arith.constant 0 : i32
    return %arg0, %c0_i32 : i32, i32
  }
  func.func @transform_1(%arg0: i32) -> (i32, i32) {
    %c0_i32 = arith.constant 0 : i32
    %c0_i32_0 = arith.constant 0 : i32
    %c0_i32_1 = arith.constant 0 : i32
    return %c0_i32, %c0_i32_0 : i32, i32
  }
  func.func @transform_2(%arg0: i32) -> (i32, i32) {
    %c0_i32 = arith.constant 0 : i32
    %c0_i32_0 = arith.constant 0 : i32
    %c0_i32_1 = arith.constant 0 : i32
    return %c0_i32, %c0_i32_0 : i32, i32
  }
  func.func @transform_3(%arg0: i32) -> (i32, i32) {
    %c0_i32 = arith.constant 0 : i32
    %c0_i32_0 = arith.constant 0 : i32
    %c0_i32_1 = arith.constant 0 : i32
    return %c0_i32, %c0_i32_0 : i32, i32
  }
  func.func @transform_4(%arg0: i32) -> (i32, i32) {
    %c0_i32 = arith.constant 0 : i32
    %c0_i32_0 = arith.constant 0 : i32
    %c0_i32_1 = arith.constant 0 : i32
    return %c0_i32, %c0_i32_0 : i32, i32
  }
  func.func @transform_5(%arg0: i32) -> (i32, i32) {
    %c0_i32 = arith.constant 0 : i32
    %c0_i32_0 = arith.constant 0 : i32
    %c0_i32_1 = arith.constant 0 : i32
    return %c0_i32, %c0_i32_0 : i32, i32
  }
  func.func @transform_6(%arg0: i32) -> (i32, i32) {
    %c0_i32 = arith.constant 0 : i32
    %c0_i32_0 = arith.constant 0 : i32
    %c0_i32_1 = arith.constant 0 : i32
    return %c0_i32, %c0_i32_0 : i32, i32
  }
  func.func @transform_7(%arg0: i32) -> (i32, i32) {
    %c0_i32 = arith.constant 0 : i32
    %c0_i32_0 = arith.constant 0 : i32
    %c0_i32_1 = arith.constant 0 : i32
    return %c0_i32, %c0_i32_0 : i32, i32
  }
  func.func @transform_8(%arg0: i32) -> (i32, i32) {
    %c0_i32 = arith.constant 0 : i32
    %c0_i32_0 = arith.constant 0 : i32
    %c0_i32_1 = arith.constant 0 : i32
    return %c0_i32, %c0_i32_0 : i32, i32
  }
  func.func @transform_9(%arg0: i32) -> (i32, i32) {
    %c0_i32 = arith.constant 0 : i32
    %c0_i32_0 = arith.constant 0 : i32
    return %arg0, %c0_i32 : i32, i32
  }
}

</mosaic_0001>

<llo_original>
// kernel: autoencoder_forward.1
$region0: #{autoencoder_forward.1}
  #allocation0 [shape = 'u32[]', space=smem, size = 0x4, offset = 0x4, fixed_abs, tag = 'smem constant byte address 0x4 - core index']
  #allocation1 [shape = 'u32[144,128]{1,0:T(1,128)}', space=vmem, size = 0x12000, scoped, tag = 'internal scratch']
  %s0 = inlined_call_operand.hbm [shape: f32[64,256], index: 0, kind: input, shape index: {}]
  %s1 = inlined_call_operand.hbm [shape: bf16[256,128], index: 1, kind: input, shape index: {}]
  %s2 = inlined_call_operand.vmem [shape: f32[1,128], index: 2, kind: input, shape index: {}]
  %s3 = inlined_call_operand.hbm [shape: bf16[128,128], index: 3, kind: input, shape index: {}]
  %s4 = inlined_call_operand.vmem [shape: f32[1,128], index: 4, kind: input, shape index: {}]
  %s5 = inlined_call_operand.hbm [shape: bf16[128,128], index: 5, kind: input, shape index: {}]
  %s6 = inlined_call_operand.vmem [shape: f32[1,128], index: 6, kind: input, shape index: {}]
  %s7 = inlined_call_operand.hbm [shape: bf16[128,256], index: 7, kind: input, shape index: {}]
  %s8 = inlined_call_operand.vmem [shape: f32[1,256], index: 8, kind: input, shape index: {}]
  %s9 = inlined_call_operand.hbm [shape: f32[64,256], index: 9, kind: output, shape index: {}]
  %s10 = sld [smem:[#allocation0]]
  $region66: #{autoencoder_forward.1} parent=0
    _
  %s12 = ssub.s32 1, %s10
  %s13 = scalar_select 0, %s12, %s10
  $region1: #{autoencoder_forward.1} parent=0
    #allocation2 [shape = 'u8[65536]{0}', space=vmem, size = 0x10000, scoped, tag = 'input window, operand 0, single buffered']
    #allocation3 [shape = 's32[1]{0}', space=sflag, size = 0x4, scoped, tag = 'scoped memory for autoencoder_forward.1']
    #allocation4 [shape = 's32[1]{0}', space=sflag, size = 0x4, scoped, tag = 'scoped memory for autoencoder_forward.1']
    #allocation5 [shape = 'u8[65536]{0}', space=vmem, size = 0x10000, scoped, tag = 'input window, operand 1, single buffered']
    #allocation6 [shape = 's32[1]{0}', space=sflag, size = 0x4, scoped, tag = 'scoped memory for autoencoder_forward.1']
    #allocation7 [shape = 'u8[32768]{0}', space=vmem, size = 0x8000, scoped, tag = 'input window, operand 3, single buffered']
    #allocation8 [shape = 'u8[32768]{0}', space=vmem, size = 0x8000, scoped, tag = 'input window, operand 5, single buffered']
    #allocation9 [shape = 's32[1]{0}', space=sflag, size = 0x4, scoped, tag = 'scoped memory for autoencoder_forward.1']
    #allocation10 [shape = 'u8[65536]{0}', space=vmem, size = 0x10000, scoped, tag = 'input window, operand 7, single buffered']
    #allocation11 [shape = 'u8[65536]{0}', space=vmem, size = 0x10000, scoped, tag = 'output window, operand 0, single buffered']
    %14 = vsyncpa [#allocation3], 0
    %15 = vsyncpa [#allocation6], 0
    %16 = vsyncpa [#allocation9], 0
    %17 = vsyncpa [#allocation4], 0
    // Predicated region
    $region2: #{autoencoder_forward.1} parent=1 // pred_check
      _
    $region3: #{autoencoder_forward.1} parent=1 // pred_check_branch
      %19 = sbr.rel (0) target = $region5
    $region4: #{autoencoder_forward.1} parent=1 // pred_region
      %s21 = ssub.s32 2048, 2048
      %22 = vsyncadd [#allocation3], %s21
      %s23 = sshll.u32 [#allocation2], 4
      %s24 = int_to_ptr.vmem [resolvable:$true] %s23
      %29 = dma.hbm_to_vmem [thread:$0]  %s0, 2048, %s24, [#allocation3], 256, 256, 16
    $region5: #{autoencoder_forward.1} parent=1 // pred_fallthru
      _
    // Predicated region
    $region6: #{autoencoder_forward.1} parent=1 // pred_check
      _
    $region7: #{autoencoder_forward.1} parent=1 // pred_check_branch
      %31 = sbr.rel (0) target = $region9
    $region8: #{autoencoder_forward.1} parent=1 // pred_region
      %s33 = ssub.s32 2048, 2048
      %34 = vsyncadd [#allocation6], %s33
      %s35 = sshll.u32 [#allocation5], 4
      %s36 = int_to_ptr.vmem [resolvable:$true] %s35
      %41 = dma.hbm_to_vmem [thread:$0]  %s1, 2048, %s36, [#allocation6], 64, 64, 4
    $region9: #{autoencoder_forward.1} parent=1 // pred_fallthru
      _
    // Predicated region
    $region10: #{autoencoder_forward.1} parent=1 // pred_check
      _
    $region11: #{autoencoder_forward.1} parent=1 // pred_check_branch
      %43 = sbr.rel (0) target = $region13
    $region12: #{autoencoder_forward.1} parent=1 // pred_region
      _
    $region13: #{autoencoder_forward.1} parent=1 // pred_fallthru
      _
    // Predicated region
    $region14: #{autoencoder_forward.1} parent=1 // pred_check
      _
    $region15: #{autoencoder_forward.1} parent=1 // pred_check_branch
      %45 = sbr.rel (0) target = $region17
    $region16: #{autoencoder_forward.1} parent=1 // pred_region
      %s47 = ssub.s32 1024, 1024
      %48 = vsyncadd [#allocation6], %s47
      %s49 = sshll.u32 [#allocation7], 4
      %s50 = int_to_ptr.vmem [resolvable:$true] %s49
      %55 = dma.hbm_to_vmem [thread:$0]  %s3, 1024, %s50, [#allocation6], 64, 64, 4
    $region17: #{autoencoder_forward.1} parent=1 // pred_fallthru
      _
    // Predicated region
    $region18: #{autoencoder_forward.1} parent=1 // pred_check
      _
    $region19: #{autoencoder_forward.1} parent=1 // pred_check_branch
      %57 = sbr.rel (0) target = $region21
    $region20: #{autoencoder_forward.1} parent=1 // pred_region
      _
    $region21: #{autoencoder_forward.1} parent=1 // pred_fallthru
      _
    // Predicated region
    $region22: #{autoencoder_forward.1} parent=1 // pred_check
      _
    $region23: #{autoencoder_forward.1} parent=1 // pred_check_branch
      %59 = sbr.rel (0) target = $region25
    $region24: #{autoencoder_forward.1} parent=1 // pred_region
      %s61 = ssub.s32 1024, 1024
      %62 = vsyncadd [#allocation9], %s61
      %s63 = sshll.u32 [#allocation8], 4
      %s64 = int_to_ptr.vmem [resolvable:$true] %s63
      %69 = dma.hbm_to_vmem [thread:$0]  %s5, 1024, %s64, [#allocation9], 64, 64, 4
    $region25: #{autoencoder_forward.1} parent=1 // pred_fallthru
      _
    // Predicated region
    $region26: #{autoencoder_forward.1} parent=1 // pred_check
      _
    $region27: #{autoencoder_forward.1} parent=1 // pred_check_branch
      %71 = sbr.rel (0) target = $region29
    $region28: #{autoencoder_forward.1} parent=1 // pred_region
      _
    $region29: #{autoencoder_forward.1} parent=1 // pred_fallthru
      _
    // Predicated region
    $region30: #{autoencoder_forward.1} parent=1 // pred_check
      _
    $region31: #{autoencoder_forward.1} parent=1 // pred_check_branch
      %73 = sbr.rel (0) target = $region33
    $region32: #{autoencoder_forward.1} parent=1 // pred_region
      %s75 = ssub.s32 2048, 2048
      %76 = vsyncadd [#allocation9], %s75
      %s77 = sshll.u32 [#allocation10], 4
      %s78 = int_to_ptr.vmem [resolvable:$true] %s77
      %83 = dma.hbm_to_vmem [thread:$0]  %s7, 2048, %s78, [#allocation9], 128, 128, 8
    $region33: #{autoencoder_forward.1} parent=1 // pred_fallthru
      _
    // Predicated region
    $region34: #{autoencoder_forward.1} parent=1 // pred_check
      _
    $region35: #{autoencoder_forward.1} parent=1 // pred_check_branch
      %85 = sbr.rel (0) target = $region37
    $region36: #{autoencoder_forward.1} parent=1 // pred_region
      _
    $region37: #{autoencoder_forward.1} parent=1 // pred_fallthru
      _
    // Predicated region
    $region38: #{autoencoder_forward.1} parent=1 // pred_check
      _
    $region39: #{autoencoder_forward.1} parent=1 // pred_check_branch
      %87 = sbr.rel (0) target = $region41
    $region40: #{autoencoder_forward.1} parent=1 // pred_region
      %88 = dma.done [#allocation3], 2048
    $region41: #{autoencoder_forward.1} parent=1 // pred_fallthru
      _
    // Predicated region
    $region42: #{autoencoder_forward.1} parent=1 // pred_check
      _
    $region43: #{autoencoder_forward.1} parent=1 // pred_check_branch
      %90 = sbr.rel (0) target = $region45
    $region44: #{autoencoder_forward.1} parent=1 // pred_region
      %91 = dma.done [#allocation6], 2048
    $region45: #{autoencoder_forward.1} parent=1 // pred_fallthru
      _
    // Predicated region
    $region46: #{autoencoder_forward.1} parent=1 // pred_check
      _
    $region47: #{autoencoder_forward.1} parent=1 // pred_check_branch
      %93 = sbr.rel (0) target = $region49
    $region48: #{autoencoder_forward.1} parent=1 // pred_region
      %94 = dma.done [#allocation6], 1024
    $region49: #{autoencoder_forward.1} parent=1 // pred_fallthru
      _
    // Predicated region
    $region50: #{autoencoder_forward.1} parent=1 // pred_check
      _
    $region51: #{autoencoder_forward.1} parent=1 // pred_check_branch
      %96 = sbr.rel (0) target = $region53
    $region52: #{autoencoder_forward.1} parent=1 // pred_region
      %97 = dma.done [#allocation9], 1024
    $region53: #{autoencoder_forward.1} parent=1 // pred_fallthru
      _
    // Predicated region
    $region54: #{autoencoder_forward.1} parent=1 // pred_check
      _
    $region55: #{autoencoder_forward.1} parent=1 // pred_check_branch
      %99 = sbr.rel (0) target = $region57
    $region56: #{autoencoder_forward.1} parent=1 // pred_region
      %100 = dma.done [#allocation9], 2048
    $region57: #{autoencoder_forward.1} parent=1 // pred_fallthru
      _
    %v102 = vld [vmem:[#allocation2] sm:$0xff]
    %v103 = vld [vmem:[#allocation2 + $0x8] sm:$0xff]
    %v104 = vld [vmem:[#allocation2 + $0x10] sm:$0xff]
    %v105 = vld [vmem:[#allocation2 + $0x18] sm:$0xff]
    %v106 = vld [vmem:[#allocation2 + $0x20] sm:$0xff]
    %v107 = vld [vmem:[#allocation2 + $0x28] sm:$0xff]
    %v108 = vld [vmem:[#allocation2 + $0x30] sm:$0xff]
    %v109 = vld [vmem:[#allocation2 + $0x38] sm:$0xff]
    %v110 = vld [vmem:[#allocation2 + $0x40] sm:$0xff]
    %v111 = vld [vmem:[#allocation2 + $0x48] sm:$0xff]
    %v112 = vld [vmem:[#allocation2 + $0x50] sm:$0xff]
    %v113 = vld [vmem:[#allocation2 + $0x58] sm:$0xff]
    %v114 = vld [vmem:[#allocation2 + $0x60] sm:$0xff]
    %v115 = vld [vmem:[#allocation2 + $0x68] sm:$0xff]
    %v116 = vld [vmem:[#allocation2 + $0x70] sm:$0xff]
    %v117 = vld [vmem:[#allocation2 + $0x78] sm:$0xff]
    %v118 = vpack.c.bf16 %v104, %v102
    %v119 = vpack.c.bf16 %v105, %v103
    %v120 = vpack.c.bf16 %v108, %v106
    %v121 = vpack.c.bf16 %v109, %v107
    %v122 = vpack.c.bf16 %v112, %v110
    %v123 = vpack.c.bf16 %v113, %v111
    %v124 = vpack.c.bf16 %v116, %v114
    %v125 = vpack.c.bf16 %v117, %v115
    %v126 = vld [vmem:[#allocation5] sm:$0xf]
    %v127 = vld [vmem:[#allocation5 + $0x4] sm:$0xf]
    %v128 = vld [vmem:[#allocation5 + $0x8] sm:$0xf]
    %v129 = vld [vmem:[#allocation5 + $0xc] sm:$0xf]
    %v130 = vld [vmem:[#allocation5 + $0x10] sm:$0xf]
    %v131 = vld [vmem:[#allocation5 + $0x14] sm:$0xf]
    %v132 = vld [vmem:[#allocation5 + $0x18] sm:$0xf]
    %v133 = vld [vmem:[#allocation5 + $0x1c] sm:$0xf]
    %v134 = vld [vmem:[#allocation5 + $0x20] sm:$0xf]
    %v135 = vld [vmem:[#allocation5 + $0x24] sm:$0xf]
    %v136 = vld [vmem:[#allocation5 + $0x28] sm:$0xf]
    %v137 = vld [vmem:[#allocation5 + $0x2c] sm:$0xf]
    %v138 = vld [vmem:[#allocation5 + $0x30] sm:$0xf]
    %v139 = vld [vmem:[#allocation5 + $0x34] sm:$0xf]
    %v140 = vld [vmem:[#allocation5 + $0x38] sm:$0xf]
    %v141 = vld [vmem:[#allocation5 + $0x3c] sm:$0xf]
    %v142 = vld [vmem:[#allocation5 + $0x40] sm:$0xf]
    %v143 = vld [vmem:[#allocation5 + $0x44] sm:$0xf]
    %v144 = vld [vmem:[#allocation5 + $0x48] sm:$0xf]
    %v145 = vld [vmem:[#allocation5 + $0x4c] sm:$0xf]
    %v146 = vld [vmem:[#allocation5 + $0x50] sm:$0xf]
    %v147 = vld [vmem:[#allocation5 + $0x54] sm:$0xf]
    %v148 = vld [vmem:[#allocation5 + $0x58] sm:$0xf]
    %v149 = vld [vmem:[#allocation5 + $0x5c] sm:$0xf]
    %v150 = vld [vmem:[#allocation5 + $0x60] sm:$0xf]
    %v151 = vld [vmem:[#allocation5 + $0x64] sm:$0xf]
    %v152 = vld [vmem:[#allocation5 + $0x68] sm:$0xf]
    %v153 = vld [vmem:[#allocation5 + $0x6c] sm:$0xf]
    %v154 = vld [vmem:[#allocation5 + $0x70] sm:$0xf]
    %v155 = vld [vmem:[#allocation5 + $0x74] sm:$0xf]
    %v156 = vld [vmem:[#allocation5 + $0x78] sm:$0xf]
    %v157 = vld [vmem:[#allocation5 + $0x7c] sm:$0xf]
    %v158 = vld [vmem:[%s2] sm:$0x1]
    %v160 = vlaneseq
    %v161 = vshrl.u32 %v160, 7
    %v162 = vsub.s32 0, %v161
    %v163 = vrot.slane %v158, %v162
    %v197 = vunpack.c.l.b16 %v126
    %v198 = vunpack.c.l.b16 %v127
    %v199 = vunpack.c.l.b16 %v128
    %v200 = vunpack.c.l.b16 %v129
    %v201 = vunpack.c.l.b16 %v130
    %v202 = vunpack.c.l.b16 %v131
    %v203 = vunpack.c.l.b16 %v132
    %v204 = vunpack.c.l.b16 %v133
    %v205 = vunpack.c.l.b16 %v134
    %v206 = vunpack.c.l.b16 %v135
    %v207 = vunpack.c.l.b16 %v136
    %v208 = vunpack.c.l.b16 %v137
    %v209 = vunpack.c.l.b16 %v138
    %v210 = vunpack.c.l.b16 %v139
    %v211 = vunpack.c.l.b16 %v140
    %v212 = vunpack.c.l.b16 %v141
    %v213 = vunpack.c.l.b16 %v142
    %v214 = vunpack.c.l.b16 %v143
    %v215 = vunpack.c.l.b16 %v144
    %v216 = vunpack.c.l.b16 %v145
    %v217 = vunpack.c.l.b16 %v146
    %v218 = vunpack.c.l.b16 %v147
    %v219 = vunpack.c.l.b16 %v148
    %v220 = vunpack.c.l.b16 %v149
    %v221 = vunpack.c.l.b16 %v150
    %v222 = vunpack.c.l.b16 %v151
    %v223 = vunpack.c.l.b16 %v152
    %v224 = vunpack.c.l.b16 %v153
    %v225 = vunpack.c.l.b16 %v154
    %v226 = vunpack.c.l.b16 %v155
    %v227 = vunpack.c.l.b16 %v156
    %v228 = vunpack.c.l.b16 %v157
    %v229 = vpack.c.b16 %v198, %v197
    %v230 = vpack.c.b16 %v200, %v199
    %v231 = vpack.c.b16 %v202, %v201
    %v232 = vpack.c.b16 %v204, %v203
    %v233 = vpack.c.b16 %v206, %v205
    %v234 = vpack.c.b16 %v208, %v207
    %v235 = vpack.c.b16 %v210, %v209
    %v236 = vpack.c.b16 %v212, %v211
    %v237 = vpack.c.b16 %v214, %v213
    %v238 = vpack.c.b16 %v216, %v215
    %v239 = vpack.c.b16 %v218, %v217
    %v240 = vpack.c.b16 %v220, %v219
    %v241 = vpack.c.b16 %v222, %v221
    %v242 = vpack.c.b16 %v224, %v223
    %v243 = vpack.c.b16 %v226, %v225
    %v244 = vpack.c.b16 %v228, %v227
    %261 = vmatprep.subr.bf16.mxu0 0
    %262 = vmatpush1.bf16.msra.mxu0 %v229
    %263 = vmatprep.subr.bf16.mxu0 0
    %264 = vmatpush1.bf16.msra.mxu0 %v230
    %265 = vmatprep.subr.bf16.mxu0 0
    %266 = vmatpush1.bf16.msra.mxu0 %v231
    %267 = vmatprep.subr.bf16.mxu0 0
    %268 = vmatpush1.bf16.msra.mxu0 %v232
    %269 = vmatprep.subr.bf16.mxu0 0
    %270 = vmatpush1.bf16.msra.mxu0 %v233
    %271 = vmatprep.subr.bf16.mxu0 0
    %272 = vmatpush1.bf16.msra.mxu0 %v234
    %273 = vmatprep.subr.bf16.mxu0 0
    %274 = vmatpush1.bf16.msra.mxu0 %v235
    %275 = vmatprep.subr.bf16.mxu0 0
    %276 = vmatpush1.bf16.msra.mxu0 %v236
    %277 = vmatprep.subr.bf16.mxu0 0
    %278 = vmatpush1.bf16.msra.mxu0 %v237
    %279 = vmatprep.subr.bf16.mxu0 0
    %280 = vmatpush1.bf16.msra.mxu0 %v238
    %281 = vmatprep.subr.bf16.mxu0 0
    %282 = vmatpush1.bf16.msra.mxu0 %v239
    %283 = vmatprep.subr.bf16.mxu0 0
    %284 = vmatpush1.bf16.msra.mxu0 %v240
    %285 = vmatprep.subr.bf16.mxu0 0
    %286 = vmatpush1.bf16.msra.mxu0 %v241
    %287 = vmatprep.subr.bf16.mxu0 0
    %288 = vmatpush1.bf16.msra.mxu0 %v242
    %289 = vmatprep.subr.bf16.mxu0 0
    %290 = vmatpush1.bf16.msra.mxu0 %v243
    %291 = vmatprep.subr.bf16.mxu0 0
    %292 = vmatpush1.bf16.msra.mxu0 %v244
    %293 = vmatprep.mubr.bf16.mxu0 %v119
    %294 = vmatmul.mubr.bf16.gmra.mrb[0].mxu0 %v118
    %v295 = vpop.f32.mrb[0].mxu0
    %v296 = vadd.f32 %v163, %v295
    %v297 = vpop.f32.mrb[0].mxu0
    %v298 = vpop.f32.mrb[0].mxu0
    %v299 = vadd.f32 %v163, %v298
    %v300 = vpop.f32.mrb[0].mxu0
    %301 = vmatprep.mubr.bf16.mxu0 %v121
    %302 = vmatmul.mubr.bf16.gmra.mrb[0].mxu0 %v120
    %v303 = vpop.f32.mrb[0].mxu0
    %v304 = vadd.f32 %v163, %v303
    %v305 = vpop.f32.mrb[0].mxu0
    %v306 = vpop.f32.mrb[0].mxu0
    %v307 = vadd.f32 %v163, %v306
    %v308 = vpop.f32.mrb[0].mxu0
    %309 = vmatprep.mubr.bf16.mxu0 %v123
    %310 = vmatmul.mubr.bf16.gmra.mrb[0].mxu0 %v122
    %v311 = vpop.f32.mrb[0].mxu0
    %v312 = vadd.f32 %v163, %v311
    %v313 = vpop.f32.mrb[0].mxu0
    %v314 = vpop.f32.mrb[0].mxu0
    %v315 = vadd.f32 %v163, %v314
    %v316 = vpop.f32.mrb[0].mxu0
    %317 = vmatprep.mubr.bf16.mxu0 %v125
    %318 = vmatmul.mubr.bf16.gmra.mrb[0].mxu0 %v124
    %v319 = vpop.f32.mrb[0].mxu0
    %v320 = vadd.f32 %v163, %v319
    %v321 = vpop.f32.mrb[0].mxu0
    %v322 = vpop.f32.mrb[0].mxu0
    %v323 = vadd.f32 %v163, %v322
    %v324 = vpop.f32.mrb[0].mxu0
    %325 = vdwg.mxu0
    %v326 = vmax.f32 %v296, 0.0
    %v327 = vmax.f32 %v299, 0.0
    %v328 = vmax.f32 %v304, 0.0
    %v329 = vmax.f32 %v307, 0.0
    %v330 = vmax.f32 %v312, 0.0
    %v331 = vmax.f32 %v315, 0.0
    %v332 = vmax.f32 %v320, 0.0
    %v333 = vmax.f32 %v323, 0.0
    %v334 = vpack.c.bf16 %v327, %v326
    %v335 = vpack.c.bf16 %v329, %v328
    %v336 = vpack.c.bf16 %v331, %v330
    %v337 = vpack.c.bf16 %v333, %v332
    %v338 = vld [vmem:[#allocation7] sm:$0xf]
    %v339 = vld [vmem:[#allocation7 + $0x4] sm:$0xf]
    %v340 = vld [vmem:[#allocation7 + $0x8] sm:$0xf]
    %v341 = vld [vmem:[#allocation7 + $0xc] sm:$0xf]
    %v342 = vld [vmem:[#allocation7 + $0x10] sm:$0xf]
    %v343 = vld [vmem:[#allocation7 + $0x14] sm:$0xf]
    %v344 = vld [vmem:[#allocation7 + $0x18] sm:$0xf]
    %v345 = vld [vmem:[#allocation7 + $0x1c] sm:$0xf]
    %v346 = vld [vmem:[#allocation7 + $0x20] sm:$0xf]
    %v347 = vld [vmem:[#allocation7 + $0x24] sm:$0xf]
    %v348 = vld [vmem:[#allocation7 + $0x28] sm:$0xf]
    %v349 = vld [vmem:[#allocation7 + $0x2c] sm:$0xf]
    %v350 = vld [vmem:[#allocation7 + $0x30] sm:$0xf]
    %v351 = vld [vmem:[#allocation7 + $0x34] sm:$0xf]
    %v352 = vld [vmem:[#allocation7 + $0x38] sm:$0xf]
    %v353 = vld [vmem:[#allocation7 + $0x3c] sm:$0xf]
    %v354 = vld [vmem:[%s4] sm:$0x1]
    %v356 = vlaneseq
    %v357 = vshrl.u32 %v356, 7
    %v358 = vsub.s32 0, %v357
    %v359 = vrot.slane %v354, %v358
    %v377 = vunpack.c.l.b16 %v338
    %v378 = vunpack.c.l.b16 %v339
    %v379 = vunpack.c.l.b16 %v340
    %v380 = vunpack.c.l.b16 %v341
    %v381 = vunpack.c.l.b16 %v342
    %v382 = vunpack.c.l.b16 %v343
    %v383 = vunpack.c.l.b16 %v344
    %v384 = vunpack.c.l.b16 %v345
    %v385 = vunpack.c.l.b16 %v346
    %v386 = vunpack.c.l.b16 %v347
    %v387 = vunpack.c.l.b16 %v348
    %v388 = vunpack.c.l.b16 %v349
    %v389 = vunpack.c.l.b16 %v350
    %v390 = vunpack.c.l.b16 %v351
    %v391 = vunpack.c.l.b16 %v352
    %v392 = vunpack.c.l.b16 %v353
    %v393 = vpack.c.b16 %v378, %v377
    %v394 = vpack.c.b16 %v380, %v379
    %v395 = vpack.c.b16 %v382, %v381
    %v396 = vpack.c.b16 %v384, %v383
    %v397 = vpack.c.b16 %v386, %v385
    %v398 = vpack.c.b16 %v388, %v387
    %v399 = vpack.c.b16 %v390, %v389
    %v400 = vpack.c.b16 %v392, %v391
    %409 = vmatprep.subr.bf16.mxu0 0
    %410 = vmatpush1.bf16.msra.mxu0 %v393
    %411 = vmatprep.subr.bf16.mxu0 0
    %412 = vmatpush1.bf16.msra.mxu0 %v394
    %413 = vmatprep.subr.bf16.mxu0 0
    %414 = vmatpush1.bf16.msra.mxu0 %v395
    %415 = vmatprep.subr.bf16.mxu0 0
    %416 = vmatpush1.bf16.msra.mxu0 %v396
    %417 = vmatprep.subr.bf16.mxu0 0
    %418 = vmatpush1.bf16.msra.mxu0 %v397
    %419 = vmatprep.subr.bf16.mxu0 0
    %420 = vmatpush1.bf16.msra.mxu0 %v398
    %421 = vmatprep.subr.bf16.mxu0 0
    %422 = vmatpush1.bf16.msra.mxu0 %v399
    %423 = vmatprep.subr.bf16.mxu0 0
    %424 = vmatpush1.bf16.msra.mxu0 %v400
    %425 = vmatprep.subr.bf16.mxu0 0
    %426 = vmatpush1.bf16.msra.mxu0 0
    %427 = vmatprep.subr.bf16.mxu0 0
    %428 = vmatpush1.bf16.msra.mxu0 0
    %429 = vmatprep.subr.bf16.mxu0 0
    %430 = vmatpush1.bf16.msra.mxu0 0
    %431 = vmatprep.subr.bf16.mxu0 0
    %432 = vmatpush1.bf16.msra.mxu0 0
    %433 = vmatprep.subr.bf16.mxu0 0
    %434 = vmatpush1.bf16.msra.mxu0 0
    %435 = vmatprep.subr.bf16.mxu0 0
    %436 = vmatpush1.bf16.msra.mxu0 0
    %437 = vmatprep.subr.bf16.mxu0 0
    %438 = vmatpush1.bf16.msra.mxu0 0
    %439 = vmatprep.subr.bf16.mxu0 0
    %440 = vmatpush1.bf16.msra.mxu0 0
    %441 = vmatprep.mubr.bf16.mxu0 0
    %442 = vmatmul.mubr.bf16.gmra.mrb[0].mxu0 %v334
    %v443 = vpop.f32.mrb[0].mxu0
    %v444 = vadd.f32 %v359, %v443
    %v445 = vpop.f32.mrb[0].mxu0
    %v446 = vpop.f32.mrb[0].mxu0
    %v447 = vadd.f32 %v359, %v446
    %v448 = vpop.f32.mrb[0].mxu0
    %449 = vmatprep.mubr.bf16.mxu0 0
    %450 = vmatmul.mubr.bf16.gmra.mrb[0].mxu0 %v335
    %v451 = vpop.f32.mrb[0].mxu0
    %v452 = vadd.f32 %v359, %v451
    %v453 = vpop.f32.mrb[0].mxu0
    %v454 = vpop.f32.mrb[0].mxu0
    %v455 = vadd.f32 %v359, %v454
    %v456 = vpop.f32.mrb[0].mxu0
    %457 = vmatprep.mubr.bf16.mxu0 0
    %458 = vmatmul.mubr.bf16.gmra.mrb[0].mxu0 %v336
    %v459 = vpop.f32.mrb[0].mxu0
    %v460 = vadd.f32 %v359, %v459
    %v461 = vpop.f32.mrb[0].mxu0
    %v462 = vpop.f32.mrb[0].mxu0
    %v463 = vadd.f32 %v359, %v462
    %v464 = vpop.f32.mrb[0].mxu0
    %465 = vmatprep.mubr.bf16.mxu0 0
    %466 = vmatmul.mubr.bf16.gmra.mrb[0].mxu0 %v337
    %v467 = vpop.f32.mrb[0].mxu0
    %v468 = vadd.f32 %v359, %v467
    %v469 = vpop.f32.mrb[0].mxu0
    %v470 = vpop.f32.mrb[0].mxu0
    %v471 = vadd.f32 %v359, %v470
    %v472 = vpop.f32.mrb[0].mxu0
    %473 = vdwg.mxu0
    %v474 = vmax.f32 %v444, 0.0
    %v475 = vmax.f32 %v447, 0.0
    %v476 = vmax.f32 %v452, 0.0
    %v477 = vmax.f32 %v455, 0.0
    %v478 = vmax.f32 %v460, 0.0
    %v479 = vmax.f32 %v463, 0.0
    %v480 = vmax.f32 %v468, 0.0
    %v481 = vmax.f32 %v471, 0.0
    %v482 = vpack.c.bf16 %v475, %v474
    %v483 = vpack.c.bf16 %v477, %v476
    %v484 = vpack.c.bf16 %v479, %v478
    %v485 = vpack.c.bf16 %v481, %v480
    %v486 = vld [vmem:[#allocation8] sm:$0xf]
    %v487 = vld [vmem:[#allocation8 + $0x4] sm:$0xf]
    %v488 = vld [vmem:[#allocation8 + $0x8] sm:$0xf]
    %v489 = vld [vmem:[#allocation8 + $0xc] sm:$0xf]
    %v490 = vld [vmem:[#allocation8 + $0x10] sm:$0xf]
    %v491 = vld [vmem:[#allocation8 + $0x14] sm:$0xf]
    %v492 = vld [vmem:[#allocation8 + $0x18] sm:$0xf]
    %v493 = vld [vmem:[#allocation8 + $0x1c] sm:$0xf]
    %v494 = vld [vmem:[#allocation8 + $0x20] sm:$0xf]
    %v495 = vld [vmem:[#allocation8 + $0x24] sm:$0xf]
    %v496 = vld [vmem:[#allocation8 + $0x28] sm:$0xf]
    %v497 = vld [vmem:[#allocation8 + $0x2c] sm:$0xf]
    %v498 = vld [vmem:[#allocation8 + $0x30] sm:$0xf]
    %v499 = vld [vmem:[#allocation8 + $0x34] sm:$0xf]
    %v500 = vld [vmem:[#allocation8 + $0x38] sm:$0xf]
    %v501 = vld [vmem:[#allocation8 + $0x3c] sm:$0xf]
    %v502 = vld [vmem:[%s6] sm:$0x1]
    %v504 = vlaneseq
    %v505 = vshrl.u32 %v504, 7
    %v506 = vsub.s32 0, %v505
    %v507 = vrot.slane %v502, %v506
    %v525 = vunpack.c.l.b16 %v486
    %v526 = vunpack.c.l.b16 %v487
    %v527 = vunpack.c.l.b16 %v488
    %v528 = vunpack.c.l.b16 %v489
    %v529 = vunpack.c.l.b16 %v490
    %v530 = vunpack.c.l.b16 %v491
    %v531 = vunpack.c.l.b16 %v492
    %v532 = vunpack.c.l.b16 %v493
    %v533 = vunpack.c.l.b16 %v494
    %v534 = vunpack.c.l.b16 %v495
    %v535 = vunpack.c.l.b16 %v496
    %v536 = vunpack.c.l.b16 %v497
    %v537 = vunpack.c.l.b16 %v498
    %v538 = vunpack.c.l.b16 %v499
    %v539 = vunpack.c.l.b16 %v500
    %v540 = vunpack.c.l.b16 %v501
    %v541 = vpack.c.b16 %v526, %v525
    %v542 = vpack.c.b16 %v528, %v527
    %v543 = vpack.c.b16 %v530, %v529
    %v544 = vpack.c.b16 %v532, %v531
    %v545 = vpack.c.b16 %v534, %v533
    %v546 = vpack.c.b16 %v536, %v535
    %v547 = vpack.c.b16 %v538, %v537
    %v548 = vpack.c.b16 %v540, %v539
    %557 = vmatprep.subr.bf16.mxu0 0
    %558 = vmatpush1.bf16.msra.mxu0 %v541
    %559 = vmatprep.subr.bf16.mxu0 0
    %560 = vmatpush1.bf16.msra.mxu0 %v542
    %561 = vmatprep.subr.bf16.mxu0 0
    %562 = vmatpush1.bf16.msra.mxu0 %v543
    %563 = vmatprep.subr.bf16.mxu0 0
    %564 = vmatpush1.bf16.msra.mxu0 %v544
    %565 = vmatprep.subr.bf16.mxu0 0
    %566 = vmatpush1.bf16.msra.mxu0 %v545
    %567 = vmatprep.subr.bf16.mxu0 0
    %568 = vmatpush1.bf16.msra.mxu0 %v546
    %569 = vmatprep.subr.bf16.mxu0 0
    %570 = vmatpush1.bf16.msra.mxu0 %v547
    %571 = vmatprep.subr.bf16.mxu0 0
    %572 = vmatpush1.bf16.msra.mxu0 %v548
    %573 = vmatprep.subr.bf16.mxu0 0
    %574 = vmatpush1.bf16.msra.mxu0 0
    %575 = vmatprep.subr.bf16.mxu0 0
    %576 = vmatpush1.bf16.msra.mxu0 0
    %577 = vmatprep.subr.bf16.mxu0 0
    %578 = vmatpush1.bf16.msra.mxu0 0
    %579 = vmatprep.subr.bf16.mxu0 0
    %580 = vmatpush1.bf16.msra.mxu0 0
    %581 = vmatprep.subr.bf16.mxu0 0
    %582 = vmatpush1.bf16.msra.mxu0 0
    %583 = vmatprep.subr.bf16.mxu0 0
    %584 = vmatpush1.bf16.msra.mxu0 0
    %585 = vmatprep.subr.bf16.mxu0 0
    %586 = vmatpush1.bf16.msra.mxu0 0
    %587 = vmatprep.subr.bf16.mxu0 0
    %588 = vmatpush1.bf16.msra.mxu0 0
    %589 = vmatprep.mubr.bf16.mxu0 0
    %590 = vmatmul.mubr.bf16.gmra.mrb[0].mxu0 %v482
    %v591 = vpop.f32.mrb[0].mxu0
    %v592 = vadd.f32 %v507, %v591
    %v593 = vpop.f32.mrb[0].mxu0
    %v594 = vpop.f32.mrb[0].mxu0
    %v595 = vadd.f32 %v507, %v594
    %v596 = vpop.f32.mrb[0].mxu0
    %597 = vmatprep.mubr.bf16.mxu0 0
    %598 = vmatmul.mubr.bf16.gmra.mrb[0].mxu0 %v483
    %v599 = vpop.f32.mrb[0].mxu0
    %v600 = vadd.f32 %v507, %v599
    %v601 = vpop.f32.mrb[0].mxu0
    %v602 = vpop.f32.mrb[0].mxu0
    %v603 = vadd.f32 %v507, %v602
    %v604 = vpop.f32.mrb[0].mxu0
    %605 = vmatprep.mubr.bf16.mxu0 0
    %606 = vmatmul.mubr.bf16.gmra.mrb[0].mxu0 %v484
    %v607 = vpop.f32.mrb[0].mxu0
    %v608 = vadd.f32 %v507, %v607
    %v609 = vpop.f32.mrb[0].mxu0
    %v610 = vpop.f32.mrb[0].mxu0
    %v611 = vadd.f32 %v507, %v610
    %v612 = vpop.f32.mrb[0].mxu0
    %613 = vmatprep.mubr.bf16.mxu0 0
    %614 = vmatmul.mubr.bf16.gmra.mrb[0].mxu0 %v485
    %v615 = vpop.f32.mrb[0].mxu0
    %v616 = vadd.f32 %v507, %v615
    %v617 = vpop.f32.mrb[0].mxu0
    %v618 = vpop.f32.mrb[0].mxu0
    %v619 = vadd.f32 %v507, %v618
    %v620 = vpop.f32.mrb[0].mxu0
    %621 = vdwg.mxu0
    %v622 = vmax.f32 %v592, 0.0
    %v623 = vmax.f32 %v595, 0.0
    %v624 = vmax.f32 %v600, 0.0
    %v625 = vmax.f32 %v603, 0.0
    %v626 = vmax.f32 %v608, 0.0
    %v627 = vmax.f32 %v611, 0.0
    %v628 = vmax.f32 %v616, 0.0
    %v629 = vmax.f32 %v619, 0.0
    %v630 = vpack.c.bf16 %v623, %v622
    %v631 = vpack.c.bf16 %v625, %v624
    %v632 = vpack.c.bf16 %v627, %v626
    %v633 = vpack.c.bf16 %v629, %v628
    %v634 = vld [vmem:[#allocation10] sm:$0xff]
    %v635 = vld [vmem:[#allocation10 + $0x8] sm:$0xff]
    %v636 = vld [vmem:[#allocation10 + $0x10] sm:$0xff]
    %v637 = vld [vmem:[#allocation10 + $0x18] sm:$0xff]
    %v638 = vld [vmem:[#allocation10 + $0x20] sm:$0xff]
    %v639 = vld [vmem:[#allocation10 + $0x28] sm:$0xff]
    %v640 = vld [vmem:[#allocation10 + $0x30] sm:$0xff]
    %v641 = vld [vmem:[#allocation10 + $0x38] sm:$0xff]
    %v642 = vld [vmem:[#allocation10 + $0x40] sm:$0xff]
    %v643 = vld [vmem:[#allocation10 + $0x48] sm:$0xff]
    %v644 = vld [vmem:[#allocation10 + $0x50] sm:$0xff]
    %v645 = vld [vmem:[#allocation10 + $0x58] sm:$0xff]
    %v646 = vld [vmem:[#allocation10 + $0x60] sm:$0xff]
    %v647 = vld [vmem:[#allocation10 + $0x68] sm:$0xff]
    %v648 = vld [vmem:[#allocation10 + $0x70] sm:$0xff]
    %v649 = vld [vmem:[#allocation10 + $0x78] sm:$0xff]
    %v650 = vld [vmem:[%s8] sm:$0x3]
    %v652 = vlaneseq
    %v653 = vshrl.u32 %v652, 7
    %v654 = vsub.s32 0, %v653
    %v655 = vrot.slane %v650, %v654
    %v656 = vlaneseq
    %v657 = vshrl.u32 %v656, 7
    %v658 = vsub.s32 1, %v657
    %v659 = vrot.slane %v650, %v658
    %v678 = vunpack.c.l.b16 %v634
    %v679 = vunpack.c.h.b16 %v634
    %v680 = vunpack.c.l.b16 %v635
    %v681 = vunpack.c.h.b16 %v635
    %v682 = vunpack.c.l.b16 %v636
    %v683 = vunpack.c.h.b16 %v636
    %v684 = vunpack.c.l.b16 %v637
    %v685 = vunpack.c.h.b16 %v637
    %v686 = vunpack.c.l.b16 %v638
    %v687 = vunpack.c.h.b16 %v638
    %v688 = vunpack.c.l.b16 %v639
    %v689 = vunpack.c.h.b16 %v639
    %v690 = vunpack.c.l.b16 %v640
    %v691 = vunpack.c.h.b16 %v640
    %v692 = vunpack.c.l.b16 %v641
    %v693 = vunpack.c.h.b16 %v641
    %v694 = vunpack.c.l.b16 %v642
    %v695 = vunpack.c.h.b16 %v642
    %v696 = vunpack.c.l.b16 %v643
    %v697 = vunpack.c.h.b16 %v643
    %v698 = vunpack.c.l.b16 %v644
    %v699 = vunpack.c.h.b16 %v644
    %v700 = vunpack.c.l.b16 %v645
    %v701 = vunpack.c.h.b16 %v645
    %v702 = vunpack.c.l.b16 %v646
    %v703 = vunpack.c.h.b16 %v646
    %v704 = vunpack.c.l.b16 %v647
    %v705 = vunpack.c.h.b16 %v647
    %v706 = vunpack.c.l.b16 %v648
    %v707 = vunpack.c.h.b16 %v648
    %v708 = vunpack.c.l.b16 %v649
    %v709 = vunpack.c.h.b16 %v649
    %v710 = vpack.c.b16 %v680, %v678
    %v711 = vpack.c.b16 %v681, %v679
    %v712 = vpack.c.b16 %v684, %v682
    %v713 = vpack.c.b16 %v685, %v683
    %v714 = vpack.c.b16 %v688, %v686
    %v715 = vpack.c.b16 %v689, %v687
    %v716 = vpack.c.b16 %v692, %v690
    %v717 = vpack.c.b16 %v693, %v691
    %v718 = vpack.c.b16 %v696, %v694
    %v719 = vpack.c.b16 %v697, %v695
    %v720 = vpack.c.b16 %v700, %v698
    %v721 = vpack.c.b16 %v701, %v699
    %v722 = vpack.c.b16 %v704, %v702
    %v723 = vpack.c.b16 %v705, %v703
    %v724 = vpack.c.b16 %v708, %v706
    %v725 = vpack.c.b16 %v709, %v707
    %742 = vmatprep.subr.bf16.mxu0 %v711
    %743 = vmatpush1.bf16.msra.mxu0 %v710
    %744 = vmatprep.subr.bf16.mxu0 %v713
    %745 = vmatpush1.bf16.msra.mxu0 %v712
    %746 = vmatprep.subr.bf16.mxu0 %v715
    %747 = vmatpush1.bf16.msra.mxu0 %v714
    %748 = vmatprep.subr.bf16.mxu0 %v717
    %749 = vmatpush1.bf16.msra.mxu0 %v716
    %750 = vmatprep.subr.bf16.mxu0 %v719
    %751 = vmatpush1.bf16.msra.mxu0 %v718
    %752 = vmatprep.subr.bf16.mxu0 %v721
    %753 = vmatpush1.bf16.msra.mxu0 %v720
    %754 = vmatprep.subr.bf16.mxu0 %v723
    %755 = vmatpush1.bf16.msra.mxu0 %v722
    %756 = vmatprep.subr.bf16.mxu0 %v725
    %757 = vmatpush1.bf16.msra.mxu0 %v724
    %758 = vmatprep.subr.bf16.mxu0 0
    %759 = vmatpush1.bf16.msra.mxu0 0
    %760 = vmatprep.subr.bf16.mxu0 0
    %761 = vmatpush1.bf16.msra.mxu0 0
    %762 = vmatprep.subr.bf16.mxu0 0
    %763 = vmatpush1.bf16.msra.mxu0 0
    %764 = vmatprep.subr.bf16.mxu0 0
    %765 = vmatpush1.bf16.msra.mxu0 0
    %766 = vmatprep.subr.bf16.mxu0 0
    %767 = vmatpush1.bf16.msra.mxu0 0
    %768 = vmatprep.subr.bf16.mxu0 0
    %769 = vmatpush1.bf16.msra.mxu0 0
    %770 = vmatprep.subr.bf16.mxu0 0
    %771 = vmatpush1.bf16.msra.mxu0 0
    %772 = vmatprep.subr.bf16.mxu0 0
    %773 = vmatpush1.bf16.msra.mxu0 0
    %774 = vmatprep.mubr.bf16.mxu0 0
    %775 = vmatmul.mubr.bf16.gmra.mrb[0].mxu0 %v630
    %v776 = vpop.f32.mrb[0].mxu0
    %v777 = vadd.f32 %v655, %v776
    %v778 = vpop.f32.mrb[0].mxu0
    %v779 = vadd.f32 %v659, %v778
    %v780 = vpop.f32.mrb[0].mxu0
    %v781 = vadd.f32 %v655, %v780
    %v782 = vpop.f32.mrb[0].mxu0
    %v783 = vadd.f32 %v659, %v782
    %784 = vmatprep.mubr.bf16.mxu0 0
    %785 = vmatmul.mubr.bf16.gmra.mrb[0].mxu0 %v631
    %v786 = vpop.f32.mrb[0].mxu0
    %v787 = vadd.f32 %v655, %v786
    %v788 = vpop.f32.mrb[0].mxu0
    %v789 = vadd.f32 %v659, %v788
    %v790 = vpop.f32.mrb[0].mxu0
    %v791 = vadd.f32 %v655, %v790
    %v792 = vpop.f32.mrb[0].mxu0
    %v793 = vadd.f32 %v659, %v792
    %794 = vmatprep.mubr.bf16.mxu0 0
    %795 = vmatmul.mubr.bf16.gmra.mrb[0].mxu0 %v632
    %v796 = vpop.f32.mrb[0].mxu0
    %v797 = vadd.f32 %v655, %v796
    %v798 = vpop.f32.mrb[0].mxu0
    %v799 = vadd.f32 %v659, %v798
    %v800 = vpop.f32.mrb[0].mxu0
    %v801 = vadd.f32 %v655, %v800
    %v802 = vpop.f32.mrb[0].mxu0
    %v803 = vadd.f32 %v659, %v802
    %804 = vmatprep.mubr.bf16.mxu0 0
    %805 = vmatmul.mubr.bf16.gmra.mrb[0].mxu0 %v633
    %v806 = vpop.f32.mrb[0].mxu0
    %v807 = vadd.f32 %v655, %v806
    %v808 = vpop.f32.mrb[0].mxu0
    %v809 = vadd.f32 %v659, %v808
    %v810 = vpop.f32.mrb[0].mxu0
    %v811 = vadd.f32 %v655, %v810
    %v812 = vpop.f32.mrb[0].mxu0
    %v813 = vadd.f32 %v659, %v812
    %814 = vdwg.mxu0
    %815 = vst [vmem:[#allocation11] sm:$0xff] %v777
    %816 = vst [vmem:[#allocation11 + $0x8] sm:$0xff] %v779
    %817 = vst [vmem:[#allocation11 + $0x10] sm:$0xff] %v781
    %818 = vst [vmem:[#allocation11 + $0x18] sm:$0xff] %v783
    %819 = vst [vmem:[#allocation11 + $0x20] sm:$0xff] %v787
    %820 = vst [vmem:[#allocation11 + $0x28] sm:$0xff] %v789
    %821 = vst [vmem:[#allocation11 + $0x30] sm:$0xff] %v791
    %822 = vst [vmem:[#allocation11 + $0x38] sm:$0xff] %v793
    %823 = vst [vmem:[#allocation11 + $0x40] sm:$0xff] %v797
    %824 = vst [vmem:[#allocation11 + $0x48] sm:$0xff] %v799
    %825 = vst [vmem:[#allocation11 + $0x50] sm:$0xff] %v801
    %826 = vst [vmem:[#allocation11 + $0x58] sm:$0xff] %v803
    %827 = vst [vmem:[#allocation11 + $0x60] sm:$0xff] %v807
    %828 = vst [vmem:[#allocation11 + $0x68] sm:$0xff] %v809
    %829 = vst [vmem:[#allocation11 + $0x70] sm:$0xff] %v811
    %830 = vst [vmem:[#allocation11 + $0x78] sm:$0xff] %v813
    // Predicated region
    $region58: #{autoencoder_forward.1} parent=1 // pred_check
      _
    $region59: #{autoencoder_forward.1} parent=1 // pred_check_branch
      %832 = sbr.rel (0) target = $region61
    $region60: #{autoencoder_forward.1} parent=1 // pred_region
      %s834 = ssub.s32 2048, 2048
      %835 = vsyncadd [#allocation4], %s834
      %s836 = sshll.u32 [#allocation11], 4
      %s837 = int_to_ptr.vmem [resolvable:$true] %s836
      %842 = dma.vmem_to_hbm [thread:$0]  %s837, 2048, %s9, [#allocation4], 256, 256, 16
    $region61: #{autoencoder_forward.1} parent=1 // pred_fallthru
      _
    // Predicated region
    $region62: #{autoencoder_forward.1} parent=1 // pred_check
      _
    $region63: #{autoencoder_forward.1} parent=1 // pred_check_branch
      %844 = sbr.rel (0) target = $region65
    $region64: #{autoencoder_forward.1} parent=1 // pred_region
      %845 = dma.done [#allocation4], 2048
    $region65: #{autoencoder_forward.1} parent=1 // pred_fallthru
      _
    %846 = vsyncpa [#allocation3], 1
    %847 = vsyncpa [#allocation6], 1
    %848 = vsyncpa [#allocation9], 1
    %849 = vsyncpa [#allocation4], 1

</llo_original>
